<compile_context>
chip_gen: v5e
topology: v5e:2x2
jax: 0.10.0
libtpu: 0.0.40
codegen_flags: <defaults>
</compile_context>

<pallas_src>
import functools

import jax
import jax.numpy as jnp
from jax.experimental import pallas as pl
from jax.experimental.pallas import tpu as pltpu

_HID_PAD = 128           # hidden dim padded 50 -> 128 (lane-dense intermediate)
_MM_OUT_PAD = 128        # matmul width inside the kernel (lane-dense vregs only)
_SINGLE_BLOCK_MAX = 512  # rows at/below which we skip the grid/pipeline entirely


def simple_nn_kernel(x_ref, w1_ref, b1_ref, w2_ref, b2_ref, o_ref, *, out_dim):
    """fc1 -> ReLU -> fc2 on one batch tile.

    Matmuls run in the streamed dtype (bf16 or f32) with f32 accumulation;
    bias adds and ReLU are f32.  Only the first `out_dim` (=3) lanes of the
    lane-dense result are written back (narrow HBM store).
    """
    # fc1: (tb, 4) @ (4, 128) -> f32, + bias, ReLU (padded columns are exact 0).
    h = jnp.dot(x_ref[...], w1_ref[...], preferred_element_type=jnp.float32)
    h = jnp.maximum(h + b1_ref[...], 0.0)
    h = h.astype(w2_ref.dtype)  # back to matmul dtype (no-op in the f32 path)
    # fc2: (tb, 128) @ (128, 128) -> f32, + bias.
    o = jnp.dot(h, w2_ref[...], preferred_element_type=jnp.float32)
    o = o + b2_ref[...]
    # Narrow store: keep only the real output columns.
    o_ref[...] = o[:, :out_dim].astype(o_ref.dtype)


def _pad_params(w1, b1, w2, b2, mm_dtype):
    """Zero-pad params to lane-dense shapes; matmul weights in mm_dtype, biases f32."""
    in_dim, hid = w1.shape
    out_dim = w2.shape[1]
    w1p = jnp.zeros((in_dim, _HID_PAD), mm_dtype).at[:, :hid].set(w1.astype(mm_dtype))
    b1p = (jnp.zeros((1, _HID_PAD), jnp.float32)
           .at[:, :hid].set(jnp.asarray(b1, jnp.float32).reshape(1, -1)))
    w2p = (jnp.zeros((_HID_PAD, _MM_OUT_PAD), mm_dtype)
           .at[:hid, :out_dim].set(w2.astype(mm_dtype)))
    b2p = (jnp.zeros((1, _MM_OUT_PAD), jnp.float32)
           .at[:, :out_dim].set(jnp.asarray(b2, jnp.float32).reshape(1, -1)))
    return w1p, b1p, w2p, b2p


def simple_nn_forward(x, w1, b1, w2, b2, *, batch_tile=4096, use_bf16=True):
    B, in_dim = x.shape
    out_dim = w2.shape[1]
    mm_dtype = jnp.bfloat16 if use_bf16 else jnp.float32
    w1p, b1p, w2p, b2p = _pad_params(w1, b1, w2, b2, mm_dtype)
    kernel = functools.partial(simple_nn_kernel, out_dim=out_dim)

    if B <= _SINGLE_BLOCK_MAX:
        # Tiny batch: single full-array VMEM block, no grid / pipeline machinery.
        b8 = 8 * pl.cdiv(B, 8)
        x_in = x if b8 == B else jnp.zeros((b8, in_dim), x.dtype).at[:B].set(x)
        x_in = x_in.astype(mm_dtype)
        out = pl.pallas_call(
            kernel,
            out_shape=jax.ShapeDtypeStruct((b8, out_dim), jnp.float32),
            in_specs=[pl.BlockSpec(memory_space=pltpu.MemorySpace.VMEM)] * 5,
            out_specs=pl.BlockSpec(memory_space=pltpu.MemorySpace.VMEM),
        )(x_in, w1p, b1p, w2p, b2p)
        return out[:B] if b8 != B else out

    # Grid path: stream x / out over batch tiles; tiny weights stay VMEM-resident.
    tb = max(8, 8 * (batch_tile // 8))       # tile rows, multiple of 8
    half = 8 * pl.cdiv(pl.cdiv(B, 8), 2)     # ~ceil(B/2) rounded up to 8
    tb = min(tb, half)                       # guarantee >= 2 tiles (v7x: both TCs)
    n_tiles = pl.cdiv(B, tb)                 # last tile may be ragged (masked writes)
    x_in = x.astype(mm_dtype)                # no full row-padded copy of x

    return pl.pallas_call(
        kernel,
        out_shape=jax.ShapeDtypeStruct((B, out_dim), jnp.float32),
        grid=(n_tiles,),
        in_specs=[
            pl.BlockSpec((tb, in_dim), lambda i: (i, 0)),          # streamed x
            pl.BlockSpec((in_dim, _HID_PAD), lambda i: (0, 0)),    # resident w1
            pl.BlockSpec((1, _HID_PAD), lambda i: (0, 0)),         # resident b1
            pl.BlockSpec((_HID_PAD, _MM_OUT_PAD), lambda i: (0, 0)),  # resident w2
            pl.BlockSpec((1, _MM_OUT_PAD), lambda i: (0, 0)),      # resident b2
        ],
        out_specs=pl.BlockSpec((tb, out_dim), lambda i: (i, 0)),   # narrow (tb, 3)
        compiler_params=pltpu.CompilerParams(
            dimension_semantics=("parallel",)),
    )(x_in, w1p, b1p, w2p, b2p)


def init_params(key):
    # Deterministic init mimicking nn.Linear's uniform(-1/sqrt(fan_in), ...).
    k1, k2, k3, k4 = jax.random.split(key, 4)
    in1, hid, out = 4, 50, 3
    bound1 = 1.0 / jnp.sqrt(in1)
    bound2 = 1.0 / jnp.sqrt(hid)
    w1 = jax.random.uniform(k1, (in1, hid), jnp.float32, -bound1, bound1)
    b1 = jax.random.uniform(k2, (1, hid), jnp.float32, -bound1, bound1)
    w2 = jax.random.uniform(k3, (hid, out), jnp.float32, -bound2, bound2)
    b2 = jax.random.uniform(k4, (1, out), jnp.float32, -bound2, bound2)
    return w1, b1, w2, b2


if __name__ == "__main__":
    key = jax.random.PRNGKey(0)
    pkey, xkey, xkey2 = jax.random.split(key, 3)
    w1, b1, w2, b2 = init_params(pkey)

    def ref_fn(xx):
        return jnp.maximum(xx @ w1 + b1, 0.0) @ w2 + b2

    # 1) Tiny batch, exact f32 path (single-block, no grid).
    x_small = jax.random.normal(xkey, (8, 4), jnp.float32)
    out_f32 = jax.block_until_ready(
        simple_nn_forward(x_small, w1, b1, w2, b2, use_bf16=False))
    assert out_f32.shape == (8, 3)
    assert jnp.allclose(out_f32, ref_fn(x_small), atol=1e-5), "f32 mismatch"

    # 2) Tiny batch, default bf16-matmul path (f32 accumulation) — looser tol.
    out_bf16 = jax.block_until_ready(simple_nn_forward(x_small, w1, b1, w2, b2))
    assert out_bf16.shape == (8, 3)
    assert jnp.allclose(out_bf16, ref_fn(x_small), atol=5e-2), "bf16 mismatch"

    # 3) Batch-tiled grid path with >=2 tiles and a ragged last tile (f32 check).
    x_big = jax.random.normal(xkey2, (1032, 4), jnp.float32)
    out_big = jax.block_until_ready(
        simple_nn_forward(x_big, w1, b1, w2, b2, batch_tile=512, use_bf16=False))
    assert out_big.shape == (1032, 3)
    assert jnp.allclose(out_big, ref_fn(x_big), atol=1e-5), "grid-path mismatch"

    print("KERNEL_OK")
</pallas_src>

<mosaic_0001>
module attributes {stable_mosaic.version = 11 : i64} {
  func.func @simple_nn_kernel(%arg0: memref<8x4xf32, #tpu.memory_space<vmem>>, %arg1: memref<4x128xf32, #tpu.memory_space<vmem>>, %arg2: memref<1x128xf32, #tpu.memory_space<vmem>>, %arg3: memref<128x128xf32, #tpu.memory_space<vmem>>, %arg4: memref<1x128xf32, #tpu.memory_space<vmem>>, %arg5: memref<8x3xf32, #tpu.memory_space<vmem>>) attributes {dimension_semantics = [], scalar_prefetch = 0 : i64, scratch_operands = 0 : i64, tpu.core_type = #tpu.core_type<tc>} {
    %c0 = arith.constant 0 : index
    %c0_0 = arith.constant 0 : index
    %0 = vector.load %arg0[%c0, %c0_0] : memref<8x4xf32, #tpu.memory_space<vmem>>, vector<8x4xf32>
    %c0_1 = arith.constant 0 : index
    %c0_2 = arith.constant 0 : index
    %1 = vector.load %arg1[%c0_1, %c0_2] : memref<4x128xf32, #tpu.memory_space<vmem>>, vector<4x128xf32>
    %cst = arith.constant dense<0.000000e+00> : vector<8x128xf32>
    %2 = tpu.matmul %0, %1, %cst {dimension_numbers = #tpu.dot_dimension_numbers<[1], [0], [0], [1], [0, 0, 1, 1], [], []>} : vector<8x4xf32>, vector<4x128xf32>, vector<8x128xf32> -> vector<8x128xf32>
    %c0_3 = arith.constant 0 : index
    %c0_4 = arith.constant 0 : index
    %3 = vector.load %arg2[%c0_3, %c0_4] : memref<1x128xf32, #tpu.memory_space<vmem>>, vector<1x128xf32>
    %4 = vector.broadcast %3 : vector<1x128xf32> to vector<8x128xf32>
    %5 = arith.addf %2, %4 : vector<8x128xf32>
    %cst_5 = arith.constant 0.000000e+00 : f32
    %6 = vector.broadcast %cst_5 : f32 to vector<8x128xf32>
    %7 = arith.maximumf %5, %6 : vector<8x128xf32>
    %c0_6 = arith.constant 0 : index
    %c0_7 = arith.constant 0 : index
    %8 = vector.load %arg3[%c0_6, %c0_7] : memref<128x128xf32, #tpu.memory_space<vmem>>, vector<128x128xf32>
    %cst_8 = arith.constant dense<0.000000e+00> : vector<8x128xf32>
    %9 = tpu.matmul %7, %8, %cst_8 {dimension_numbers = #tpu.dot_dimension_numbers<[1], [0], [0], [1], [0, 0, 1, 1], [], []>} : vector<8x128xf32>, vector<128x128xf32>, vector<8x128xf32> -> vector<8x128xf32>
    %c0_9 = arith.constant 0 : index
    %c0_10 = arith.constant 0 : index
    %10 = vector.load %arg4[%c0_9, %c0_10] : memref<1x128xf32, #tpu.memory_space<vmem>>, vector<1x128xf32>
    %11 = vector.broadcast %10 : vector<1x128xf32> to vector<8x128xf32>
    %12 = arith.addf %9, %11 : vector<8x128xf32>
    %13 = vector.extract_strided_slice %12 {offsets = [0, 0], sizes = [8, 3], strides = [1, 1]} : vector<8x128xf32> to vector<8x3xf32>
    %c0_11 = arith.constant 0 : index
    %c0_12 = arith.constant 0 : index
    %14 = vector.load %arg5[%c0_11, %c0_12] : memref<8x3xf32, #tpu.memory_space<vmem>>, vector<8x3xf32>
    tpu.vector_store %arg5[%c0_11, %c0_12], %13 {strides = array<i32>} : memref<8x3xf32, #tpu.memory_space<vmem>>, vector<8x3xf32>,
    return
  }
}

</mosaic_0001>

<llo_original>
// kernel: tpu_custom_call.1
$region0: #{tpu_custom_call.1}
  #allocation0 [shape = 'u32[]', space=smem, size = 0x4, offset = 0x4, fixed_abs, tag = 'smem constant byte address 0x4 - core index']
  #allocation1 [shape = 'u32[72,128]{1,0:T(1,128)}', space=vmem, size = 0x9000, scoped, tag = 'internal scratch']
  %s0 = inlined_call_operand.vmem [shape: f32[8,4], index: 0, kind: input, shape index: {}]
  %s1 = inlined_call_operand.vmem [shape: f32[4,128], index: 1, kind: input, shape index: {}]
  %s2 = inlined_call_operand.vmem [shape: f32[1,128], index: 2, kind: input, shape index: {}]
  %s3 = inlined_call_operand.hbm [shape: f32[128,128], index: 3, kind: input, shape index: {}]
  %s4 = inlined_call_operand.vmem [shape: f32[1,128], index: 4, kind: input, shape index: {}]
  %s5 = inlined_call_operand.vmem [shape: f32[8,3], index: 5, kind: output, shape index: {}]
  %s6 = sld [smem:[#allocation0]]
  $region34: #{tpu_custom_call.1} parent=0
    _
  %s8 = ssub.s32 1, %s6
  %s9 = scalar_select 0, %s8, %s6
  $region1: #{tpu_custom_call.1} parent=0
    #allocation2 [shape = 'u8[65536]{0}', space=vmem, size = 0x10000, scoped, tag = 'input window, operand 3, single buffered']
    #allocation3 [shape = 's32[1]{0}', space=sflag, size = 0x4, scoped, tag = 'scoped memory for tpu_custom_call.1']
    %10 = vsyncpa [#allocation3], 0
    // Predicated region
    $region2: #{tpu_custom_call.1} parent=1 // pred_check
      _
    $region3: #{tpu_custom_call.1} parent=1 // pred_check_branch
      %12 = sbr.rel (0) target = $region5
    $region4: #{tpu_custom_call.1} parent=1 // pred_region
      _
    $region5: #{tpu_custom_call.1} parent=1 // pred_fallthru
      _
    // Predicated region
    $region6: #{tpu_custom_call.1} parent=1 // pred_check
      _
    $region7: #{tpu_custom_call.1} parent=1 // pred_check_branch
      %14 = sbr.rel (0) target = $region9
    $region8: #{tpu_custom_call.1} parent=1 // pred_region
      _
    $region9: #{tpu_custom_call.1} parent=1 // pred_fallthru
      _
    // Predicated region
    $region10: #{tpu_custom_call.1} parent=1 // pred_check
      _
    $region11: #{tpu_custom_call.1} parent=1 // pred_check_branch
      %16 = sbr.rel (0) target = $region13
    $region12: #{tpu_custom_call.1} parent=1 // pred_region
      _
    $region13: #{tpu_custom_call.1} parent=1 // pred_fallthru
      _
    // Predicated region
    $region14: #{tpu_custom_call.1} parent=1 // pred_check
      _
    $region15: #{tpu_custom_call.1} parent=1 // pred_check_branch
      %18 = sbr.rel (0) target = $region17
    $region16: #{tpu_custom_call.1} parent=1 // pred_region
      %20 = vsyncadd [#allocation3], 0
      %s21 = sshll.u32 %s3, 4
      %s22 = int_to_ptr.hbm [resolvable:$true] %s21
      %s23 = sshll.u32 [#allocation2], 4
      %s24 = int_to_ptr.vmem [resolvable:$true] %s23
      %29 = dma.hbm_to_vmem [thread:$0]  %s22, 2048, %s24, [#allocation3], 128, 128, 8
    $region17: #{tpu_custom_call.1} parent=1 // pred_fallthru
      _
    // Predicated region
    $region18: #{tpu_custom_call.1} parent=1 // pred_check
      _
    $region19: #{tpu_custom_call.1} parent=1 // pred_check_branch
      %31 = sbr.rel (0) target = $region21
    $region20: #{tpu_custom_call.1} parent=1 // pred_region
      _
    $region21: #{tpu_custom_call.1} parent=1 // pred_fallthru
      _
    // Predicated region
    $region22: #{tpu_custom_call.1} parent=1 // pred_check
      _
    $region23: #{tpu_custom_call.1} parent=1 // pred_check_branch
      %33 = sbr.rel (0) target = $region25
    $region24: #{tpu_custom_call.1} parent=1 // pred_region
      %35 = dma.done [#allocation3], 2048
    $region25: #{tpu_custom_call.1} parent=1 // pred_fallthru
      _
    %v36 = vld [vmem:[%s0] sm:$0xff]
    %v37 = vld [vmem:[%s1] sm:$0xf]
    %v38 = vld [vmem:[%s2] sm:$0x1]
    %v40 = vperm.slane %v38, 0
    %vm42 = vcmask 31744
    %v44 = vsel %vm42, %v36, 0
    %vm46 = vcmask 1043456
    %v48 = vsel %vm46, %v37, 0
    %50 = vmatpush.msra.mxu0 0.0
    %51 = vmatpush.msra.mxu0 0.0
    %52 = vmatpush.msra.mxu0 0.0
    %53 = vmatpush.msra.mxu0 0.0
    %54 = vmatpush.msra.mxu0 0.0
    %55 = vmatpush.msra.mxu0 0.0
    %56 = vmatpush.msra.mxu0 0.0
    %57 = vmatpush.msra.mxu0 0.0
    %58 = vmatpush.msra.mxu0 0.0
    %59 = vmatpush.msra.mxu0 0.0
    %60 = vmatpush.msra.mxu0 0.0
    %61 = vmatpush.msra.mxu0 0.0
    %62 = vmatpush.msra.mxu0 0.0
    %63 = vmatpush.msra.mxu0 0.0
    %64 = vmatpush.msra.mxu0 0.0
    %65 = vmatpush.msra.mxu0 %v48
    %66 = vmatmul.f32.gmra.mxu0 %v44
    %v67 = vpop.f32.mrf.mxu0
    %v68 = vadd.f32 %v40, %v67
    %69 = vdwg.mxu0
    %v70 = vmax.f32 %v68, 0.0
    %v71 = vld [vmem:[#allocation2] sm:$0xff]
    %v72 = vld [vmem:[#allocation2 + $0x8] sm:$0xff]
    %v73 = vld [vmem:[#allocation2 + $0x10] sm:$0xff]
    %v74 = vld [vmem:[#allocation2 + $0x18] sm:$0xff]
    %v75 = vld [vmem:[#allocation2 + $0x20] sm:$0xff]
    %v76 = vld [vmem:[#allocation2 + $0x28] sm:$0xff]
    %v77 = vld [vmem:[#allocation2 + $0x30] sm:$0xff]
    %v78 = vld [vmem:[#allocation2 + $0x38] sm:$0xff]
    %v79 = vld [vmem:[#allocation2 + $0x40] sm:$0xff]
    %v80 = vld [vmem:[#allocation2 + $0x48] sm:$0xff]
    %v81 = vld [vmem:[#allocation2 + $0x50] sm:$0xff]
    %v82 = vld [vmem:[#allocation2 + $0x58] sm:$0xff]
    %v83 = vld [vmem:[#allocation2 + $0x60] sm:$0xff]
    %v84 = vld [vmem:[#allocation2 + $0x68] sm:$0xff]
    %v85 = vld [vmem:[#allocation2 + $0x70] sm:$0xff]
    %v86 = vld [vmem:[#allocation2 + $0x78] sm:$0xff]
    %v87 = vld [vmem:[%s4] sm:$0x1]
    %v89 = vperm.slane %v87, 0
    %91 = vmatpush.msra.mxu0 %v86
    %92 = vmatpush.msra.mxu0 %v85
    %93 = vmatpush.msra.mxu0 %v84
    %94 = vmatpush.msra.mxu0 %v83
    %95 = vmatpush.msra.mxu0 %v82
    %96 = vmatpush.msra.mxu0 %v81
    %97 = vmatpush.msra.mxu0 %v80
    %98 = vmatpush.msra.mxu0 %v79
    %99 = vmatpush.msra.mxu0 %v78
    %100 = vmatpush.msra.mxu0 %v77
    %101 = vmatpush.msra.mxu0 %v76
    %102 = vmatpush.msra.mxu0 %v75
    %103 = vmatpush.msra.mxu0 %v74
    %104 = vmatpush.msra.mxu0 %v73
    %105 = vmatpush.msra.mxu0 %v72
    %106 = vmatpush.msra.mxu0 %v71
    %107 = vmatmul.f32.gmra.mxu0 %v70
    %v108 = vpop.f32.mrf.mxu0
    %v109 = vadd.f32 %v89, %v108
    %110 = vdwg.mxu0
    %vm111 = vcmask 23552
    %112 = vst.msk [vmem:[%s5] sm:$0xff] %vm111, %v109
    // Predicated region
    $region26: #{tpu_custom_call.1} parent=1 // pred_check
      _
    $region27: #{tpu_custom_call.1} parent=1 // pred_check_branch
      %114 = sbr.rel (0) target = $region29
    $region28: #{tpu_custom_call.1} parent=1 // pred_region
      _
    $region29: #{tpu_custom_call.1} parent=1 // pred_fallthru
      _
    // Predicated region
    $region30: #{tpu_custom_call.1} parent=1 // pred_check
      _
    $region31: #{tpu_custom_call.1} parent=1 // pred_check_branch
      %116 = sbr.rel (0) target = $region33
    $region32: #{tpu_custom_call.1} parent=1 // pred_region
      _
    $region33: #{tpu_custom_call.1} parent=1 // pred_fallthru
      _
    %117 = vsyncpa [#allocation3], 1

</llo_original>
